<compile_context>
chip_gen: v6e
topology: v6e:2x2x1
jax: 0.10.0
libtpu: 0.0.40
codegen_flags: <defaults>
</compile_context>

<pallas_src>
import numpy as np

import jax
import jax.numpy as jnp
from jax.experimental import pallas as pl
from jax.experimental.pallas import tpu as pltpu


def _round_up(a: int, m: int) -> int:
    return (a + m - 1) // m * m


def pack_icnet_params(weights, biases, d_x):
    """Pack per-layer (in, out) weights and biases into two contiguous buffers.

    weights[0]: (d_x + d_c, width); weights[1:-1]: (width, width);
    weights[-1]: (width, out_dim).  Returns bf16 wbuf (rows, LANE) with each layer's
    weight zero-padded to LANE output lanes at a 16-aligned row offset, and f32 bbuf
    (round_up(depth, 8), LANE) with layer i's bias in row i.
    """
    depth = len(weights)
    assert depth >= 2
    width = int(weights[0].shape[1])
    out_dim = int(weights[-1].shape[1])
    d_in = int(weights[0].shape[0])
    d_c = d_in - d_x
    lane = _round_up(max(width, out_dim), 128)   # lane-dense interior + output
    d_x_pad = _round_up(d_x, 16)                 # bf16 rows pack in sublane pairs;
    d_c_pad = _round_up(d_c, 16)                 # 16-aligned offsets keep slices tile-aligned

    rows = d_x_pad + d_c_pad + (depth - 1) * lane
    wbuf = np.zeros((rows, lane), np.float32)

    w0 = np.asarray(weights[0], np.float32)
    wbuf[0:d_x, 0:width] = w0[0:d_x]                       # x-part of layer 0
    wbuf[d_x_pad:d_x_pad + d_c, 0:width] = w0[d_x:]        # log1p(cond)-part of layer 0
    off = d_x_pad + d_c_pad
    for i in range(1, depth - 1):
        wi = np.asarray(weights[i], np.float32)            # (width, width)
        wbuf[off:off + width, 0:width] = wi
        off += lane
    wf = np.asarray(weights[-1], np.float32)               # (width, out_dim)
    wbuf[off:off + width, 0:out_dim] = wf

    brows = _round_up(depth, 8)
    bbuf = np.zeros((brows, lane), np.float32)
    for i, b in enumerate(biases):
        bb = np.asarray(b, np.float32).reshape(-1)
        bbuf[i, 0:bb.shape[0]] = bb

    return dict(
        wbuf=jnp.asarray(wbuf, dtype=jnp.bfloat16),
        bbuf=jnp.asarray(bbuf),
        depth=depth, d_x=d_x, d_c=d_c, d_x_pad=d_x_pad, d_c_pad=d_c_pad,
        lane=lane, width=width, out_dim=out_dim,
    )


def _make_icnet_kernel(depth: int, d_x_pad: int, d_c_pad: int, lane: int):
    """Kernel closure for a fixed layer count / packed-buffer layout."""
    off_c = d_x_pad
    off_h = d_x_pad + d_c_pad

    def kernel(x_ref, c_ref, w_ref, b_ref, o_ref):
        # Elementwise math stays f32; only MXU operands are cast to bf16
        # (f32 accumulation via preferred_element_type).
        x = x_ref[...].astype(jnp.bfloat16)                                  # (TB, d_x_pad)
        c = jnp.log1p(c_ref[...].astype(jnp.float32)).astype(jnp.bfloat16)   # (TB, d_c_pad)

        # Layer 0: concat folded into a split matmul.
        h = (jnp.dot(x, w_ref[0:d_x_pad, :], preferred_element_type=jnp.float32)
             + jnp.dot(c, w_ref[off_c:off_c + d_c_pad, :],
                       preferred_element_type=jnp.float32)
             + b_ref[0:1, :])
        h = jnp.maximum(h, 0.0)                                              # hidden_act = ReLU

        # Remaining hidden layers (padded to `lane` lanes; padded lanes stay exactly 0).
        off = off_h
        for i in range(1, depth - 1):
            h = (jnp.dot(h.astype(jnp.bfloat16), w_ref[off:off + lane, :],
                         preferred_element_type=jnp.float32)
                 + b_ref[i:i + 1, :])
            h = jnp.maximum(h, 0.0)
            off += lane

        # Final layer + output activation (sigmoid); lane-dense (128-wide) store.
        y = (jnp.dot(h.astype(jnp.bfloat16), w_ref[off:off + lane, :],
                     preferred_element_type=jnp.float32)
             + b_ref[depth - 1:depth, :])
        o_ref[...] = jax.nn.sigmoid(y).astype(o_ref.dtype)

    return kernel


def icnetwork_forward(x, cond, params, *, block_b=None):
    """x: (B, d_x) flattened input; cond: (B, d_c) flattened condition.

    params: output of pack_icnet_params (pack once, reuse across calls).
    Returns (B, out_dim) f32.
    """
    B = x.shape[0]
    d_x, d_c = params["d_x"], params["d_c"]
    d_x_pad, d_c_pad = params["d_x_pad"], params["d_c_pad"]
    lane, depth = params["lane"], params["depth"]
    width, out_dim = params["width"], params["out_dim"]
    wbuf, bbuf = params["wbuf"], params["bbuf"]

    # Batch tile: >=8 rows (full f32 sublanes); large tiles amortize per-grid-step
    # overhead — the whole net (<1 MiB) fits VMEM on v5e/v6e/v7x regardless.
    if block_b is None:
        block_b = min(512, _round_up(B, 8))
    b_pad = _round_up(max(B, block_b), block_b)

    x_p = jnp.pad(x.astype(jnp.float32), ((0, b_pad - B), (0, d_x_pad - d_x)))
    c_p = jnp.pad(cond.astype(jnp.float32), ((0, b_pad - B), (0, d_c_pad - d_c)))

    kernel = _make_icnet_kernel(depth, d_x_pad, d_c_pad, lane)

    flops = 2 * B * ((d_x + d_c) * width
                     + (depth - 2) * width * width
                     + width * out_dim)
    cost = pl.CostEstimate(
        flops=flops,
        transcendentals=B * (d_c + out_dim),          # log1p + sigmoid
        bytes_accessed=(x_p.size + c_p.size) * 4 + wbuf.size * 2
                       + bbuf.size * 4 + b_pad * lane * 4,
    )

    out = pl.pallas_call(
        kernel,
        out_shape=jax.ShapeDtypeStruct((b_pad, lane), jnp.float32),
        grid_spec=pltpu.PrefetchScalarGridSpec(
            num_scalar_prefetch=0,
            grid=(b_pad // block_b,),
            in_specs=[
                pl.BlockSpec((block_b, d_x_pad), lambda i: (i, 0)),
                pl.BlockSpec((block_b, d_c_pad), lambda i: (i, 0)),
                # Packed params: constant index_map -> one DMA, VMEM-resident
                # across all grid steps.
                pl.BlockSpec(wbuf.shape, lambda i: (0, 0)),
                pl.BlockSpec(bbuf.shape, lambda i: (0, 0)),
            ],
            out_specs=pl.BlockSpec((block_b, lane), lambda i: (i, 0)),
        ),
        compiler_params=pltpu.CompilerParams(
            dimension_semantics=("parallel",)),
        cost_estimate=cost,
    )(x_p, c_p, wbuf, bbuf)

    return out[:B, :out_dim]


def _reference_forward(x, cond, weights, biases):
    h = jnp.concatenate([x, jnp.log1p(cond)], axis=-1)
    for w, b in zip(weights[:-1], biases[:-1]):
        h = jnp.maximum(h @ w + b, 0.0)
    y = h @ weights[-1] + biases[-1]
    return jax.nn.sigmoid(y)


if __name__ == "__main__":
    # Small, module-consistent shapes:
    #   input_dimensions = (1, 8, 8)  -> d_x = 64
    #   output_dimensions = (4,)      -> d_c = 4, final out = 4
    #   width = 32, depth = 5         -> 4 hidden linear layers + final layer
    batch = 2
    input_dimensions = (1, 8, 8)
    output_dimensions = (4,)
    width = 32
    depth = 5

    d_x = int(np.prod(input_dimensions))
    d_c = int(np.prod(output_dimensions))
    input_size = d_x + d_c

    key = jax.random.PRNGKey(0)
    k_x, k_c, *k_params = jax.random.split(key, 2 + 2 * depth)

    # Deterministic synthetic parameters (nn.Linear, stored as (in, out) = torch (out, in)^T).
    layer_dims = [(input_size, width)] + [(width, width)] * (depth - 2) + [(width, d_c)]
    weights, biases = [], []
    for i, (fan_in, fan_out) in enumerate(layer_dims):
        bound = 1.0 / (fan_in ** 0.5)
        w = jax.random.uniform(k_params[2 * i], (fan_in, fan_out),
                               minval=-bound, maxval=bound, dtype=jnp.float32)
        b = jax.random.uniform(k_params[2 * i + 1], (1, fan_out),
                               minval=-bound, maxval=bound, dtype=jnp.float32)
        weights.append(w)
        biases.append(b)

    # Pack parameters once; at a real call-site this is reused across every forward.
    params = pack_icnet_params(weights, biases, d_x)
    # TODO(synk): for repeated per-step calls, keep the packed buffers VMEM-resident
    # across pallas_calls (cross-call prefetch / P10) instead of re-uploading each call.

    # Example inputs: x in NCHW, condition with output_dimensions shape.
    x_nchw = jax.random.normal(k_x, (batch, *input_dimensions), dtype=jnp.float32)
    cond = jax.random.uniform(k_c, (batch, *output_dimensions),
                              minval=0.0, maxval=2.0, dtype=jnp.float32)

    x_flat = x_nchw.reshape(batch, -1)          # x.flatten(1, -1)
    cond_flat = cond.reshape(batch, -1)         # input_condition.flatten(1, -1)

    out = icnetwork_forward(x_flat, cond_flat, params)
    out = out.reshape(-1, *output_dimensions)   # .view(-1, *output_dimensions)
    jax.block_until_ready(out)

    ref = _reference_forward(x_flat, cond_flat, weights, biases).reshape(
        -1, *output_dimensions)
    assert out.shape == (batch, *output_dimensions)
    # bf16 matmul operands (f32 accumulate) vs the pure-f32 reference -> loose tolerance.
    assert jnp.allclose(out, ref, atol=3e-2, rtol=0.0), "mismatch vs jnp reference"

    print("KERNEL_OK")
</pallas_src>

<mosaic_0001>
module attributes {stable_mosaic.version = 11 : i64} {
  func.func @kernel(%arg0: i32, %arg1: memref<8x64xf32, #tpu.memory_space<vmem>>, %arg2: memref<8x16xf32, #tpu.memory_space<vmem>>, %arg3: memref<592x128xbf16, #tpu.memory_space<vmem>>, %arg4: memref<8x128xf32, #tpu.memory_space<vmem>>, %arg5: memref<8x128xf32, #tpu.memory_space<vmem>>) attributes {dimension_semantics = [#tpu.dimension_semantics<parallel>], iteration_bounds = array<i64: 1>, scalar_prefetch = 0 : i64, scratch_operands = 0 : i64, tpu.core_type = #tpu.core_type<tc>, window_params = [{transform_indices = @transform_0, window_bounds = array<i64: 8, 64>}, {transform_indices = @transform_1, window_bounds = array<i64: 8, 16>}, {pipeline_mode = #tpu.pipeline_mode<synchronous>, transform_indices = @transform_2, window_bounds = array<i64: 592, 128>}, {pipeline_mode = #tpu.pipeline_mode<synchronous>, transform_indices = @transform_3, window_bounds = array<i64: 8, 128>}, {transform_indices = @transform_4, window_bounds = array<i64: 8, 128>}]} {
    %c0 = arith.constant 0 : index
    %c0_0 = arith.constant 0 : index
    %0 = vector.load %arg1[%c0, %c0_0] : memref<8x64xf32, #tpu.memory_space<vmem>>, vector<8x64xf32>
    %1 = arith.truncf %0 : vector<8x64xf32> to vector<8x64xbf16>
    %c0_1 = arith.constant 0 : index
    %c0_2 = arith.constant 0 : index
    %2 = vector.load %arg2[%c0_1, %c0_2] : memref<8x16xf32, #tpu.memory_space<vmem>>, vector<8x16xf32>
    %3 = math.log1p %2 : vector<8x16xf32>
    %4 = arith.truncf %3 : vector<8x16xf32> to vector<8x16xbf16>
    %c0_3 = arith.constant 0 : index
    %c0_4 = arith.constant 0 : index
    %5 = vector.load %arg3[%c0_3, %c0_4] : memref<592x128xbf16, #tpu.memory_space<vmem>>, vector<64x128xbf16>
    %cst = arith.constant dense<0.000000e+00> : vector<8x128xf32>
    %6 = tpu.matmul %1, %5, %cst {dimension_numbers = #tpu.dot_dimension_numbers<[1], [0], [0], [1], [0, 0, 1, 1], [], []>} : vector<8x64xbf16>, vector<64x128xbf16>, vector<8x128xf32> -> vector<8x128xf32>
    %c64 = arith.constant 64 : index
    %c0_5 = arith.constant 0 : index
    %7 = vector.load %arg3[%c64, %c0_5] : memref<592x128xbf16, #tpu.memory_space<vmem>>, vector<16x128xbf16>
    %cst_6 = arith.constant dense<0.000000e+00> : vector<8x128xf32>
    %8 = tpu.matmul %4, %7, %cst_6 {dimension_numbers = #tpu.dot_dimension_numbers<[1], [0], [0], [1], [0, 0, 1, 1], [], []>} : vector<8x16xbf16>, vector<16x128xbf16>, vector<8x128xf32> -> vector<8x128xf32>
    %9 = arith.addf %6, %8 : vector<8x128xf32>
    %c0_7 = arith.constant 0 : index
    %c0_8 = arith.constant 0 : index
    %10 = vector.load %arg4[%c0_7, %c0_8] : memref<8x128xf32, #tpu.memory_space<vmem>>, vector<1x128xf32>
    %11 = vector.broadcast %10 : vector<1x128xf32> to vector<8x128xf32>
    %12 = arith.addf %9, %11 : vector<8x128xf32>
    %cst_9 = arith.constant 0.000000e+00 : f32
    %13 = vector.broadcast %cst_9 : f32 to vector<8x128xf32>
    %14 = arith.maximumf %12, %13 : vector<8x128xf32>
    %15 = arith.truncf %14 : vector<8x128xf32> to vector<8x128xbf16>
    %c80 = arith.constant 80 : index
    %c0_10 = arith.constant 0 : index
    %16 = vector.load %arg3[%c80, %c0_10] : memref<592x128xbf16, #tpu.memory_space<vmem>>, vector<128x128xbf16>
    %cst_11 = arith.constant dense<0.000000e+00> : vector<8x128xf32>
    %17 = tpu.matmul %15, %16, %cst_11 {dimension_numbers = #tpu.dot_dimension_numbers<[1], [0], [0], [1], [0, 0, 1, 1], [], []>} : vector<8x128xbf16>, vector<128x128xbf16>, vector<8x128xf32> -> vector<8x128xf32>
    %c1 = arith.constant 1 : index
    %c0_12 = arith.constant 0 : index
    %18 = vector.load %arg4[%c1, %c0_12] : memref<8x128xf32, #tpu.memory_space<vmem>>, vector<1x128xf32>
    %19 = vector.broadcast %18 : vector<1x128xf32> to vector<8x128xf32>
    %20 = arith.addf %17, %19 : vector<8x128xf32>
    %cst_13 = arith.constant 0.000000e+00 : f32
    %21 = vector.broadcast %cst_13 : f32 to vector<8x128xf32>
    %22 = arith.maximumf %20, %21 : vector<8x128xf32>
    %23 = arith.truncf %22 : vector<8x128xf32> to vector<8x128xbf16>
    %c208 = arith.constant 208 : index
    %c0_14 = arith.constant 0 : index
    %24 = vector.load %arg3[%c208, %c0_14] : memref<592x128xbf16, #tpu.memory_space<vmem>>, vector<128x128xbf16>
    %cst_15 = arith.constant dense<0.000000e+00> : vector<8x128xf32>
    %25 = tpu.matmul %23, %24, %cst_15 {dimension_numbers = #tpu.dot_dimension_numbers<[1], [0], [0], [1], [0, 0, 1, 1], [], []>} : vector<8x128xbf16>, vector<128x128xbf16>, vector<8x128xf32> -> vector<8x128xf32>
    %c2 = arith.constant 2 : index
    %c0_16 = arith.constant 0 : index
    %26 = vector.load %arg4[%c2, %c0_16] : memref<8x128xf32, #tpu.memory_space<vmem>>, vector<1x128xf32>
    %27 = vector.broadcast %26 : vector<1x128xf32> to vector<8x128xf32>
    %28 = arith.addf %25, %27 : vector<8x128xf32>
    %cst_17 = arith.constant 0.000000e+00 : f32
    %29 = vector.broadcast %cst_17 : f32 to vector<8x128xf32>
    %30 = arith.maximumf %28, %29 : vector<8x128xf32>
    %31 = arith.truncf %30 : vector<8x128xf32> to vector<8x128xbf16>
    %c336 = arith.constant 336 : index
    %c0_18 = arith.constant 0 : index
    %32 = vector.load %arg3[%c336, %c0_18] : memref<592x128xbf16, #tpu.memory_space<vmem>>, vector<128x128xbf16>
    %cst_19 = arith.constant dense<0.000000e+00> : vector<8x128xf32>
    %33 = tpu.matmul %31, %32, %cst_19 {dimension_numbers = #tpu.dot_dimension_numbers<[1], [0], [0], [1], [0, 0, 1, 1], [], []>} : vector<8x128xbf16>, vector<128x128xbf16>, vector<8x128xf32> -> vector<8x128xf32>
    %c3 = arith.constant 3 : index
    %c0_20 = arith.constant 0 : index
    %34 = vector.load %arg4[%c3, %c0_20] : memref<8x128xf32, #tpu.memory_space<vmem>>, vector<1x128xf32>
    %35 = vector.broadcast %34 : vector<1x128xf32> to vector<8x128xf32>
    %36 = arith.addf %33, %35 : vector<8x128xf32>
    %cst_21 = arith.constant 0.000000e+00 : f32
    %37 = vector.broadcast %cst_21 : f32 to vector<8x128xf32>
    %38 = arith.maximumf %36, %37 : vector<8x128xf32>
    %39 = arith.truncf %38 : vector<8x128xf32> to vector<8x128xbf16>
    %c464 = arith.constant 464 : index
    %c0_22 = arith.constant 0 : index
    %40 = vector.load %arg3[%c464, %c0_22] : memref<592x128xbf16, #tpu.memory_space<vmem>>, vector<128x128xbf16>
    %cst_23 = arith.constant dense<0.000000e+00> : vector<8x128xf32>
    %41 = tpu.matmul %39, %40, %cst_23 {dimension_numbers = #tpu.dot_dimension_numbers<[1], [0], [0], [1], [0, 0, 1, 1], [], []>} : vector<8x128xbf16>, vector<128x128xbf16>, vector<8x128xf32> -> vector<8x128xf32>
    %c4 = arith.constant 4 : index
    %c0_24 = arith.constant 0 : index
    %42 = vector.load %arg4[%c4, %c0_24] : memref<8x128xf32, #tpu.memory_space<vmem>>, vector<1x128xf32>
    %43 = vector.broadcast %42 : vector<1x128xf32> to vector<8x128xf32>
    %44 = arith.addf %41, %43 : vector<8x128xf32>
    %45 = arith.negf %44 : vector<8x128xf32>
    %46 = math.exp %45 : vector<8x128xf32>
    %cst_25 = arith.constant 1.000000e+00 : f32
    %47 = vector.broadcast %cst_25 : f32 to vector<8x128xf32>
    %48 = arith.addf %47, %46 : vector<8x128xf32>
    %49 = arith.divf %47, %48 : vector<8x128xf32>
    %c0_26 = arith.constant 0 : index
    %c0_27 = arith.constant 0 : index
    %50 = vector.load %arg5[%c0_26, %c0_27] : memref<8x128xf32, #tpu.memory_space<vmem>>, vector<8x128xf32>
    tpu.vector_store %arg5[%c0_26, %c0_27], %49 {strides = array<i32>} : memref<8x128xf32, #tpu.memory_space<vmem>>, vector<8x128xf32>,
    return
  }
  func.func @transform_0(%arg0: i32) -> (i32, i32) {
    %c0_i32 = arith.constant 0 : i32
    %c0_i32_0 = arith.constant 0 : i32
    return %arg0, %c0_i32 : i32, i32
  }
  func.func @transform_1(%arg0: i32) -> (i32, i32) {
    %c0_i32 = arith.constant 0 : i32
    %c0_i32_0 = arith.constant 0 : i32
    return %arg0, %c0_i32 : i32, i32
  }
  func.func @transform_2(%arg0: i32) -> (i32, i32) {
    %c0_i32 = arith.constant 0 : i32
    %c0_i32_0 = arith.constant 0 : i32
    %c0_i32_1 = arith.constant 0 : i32
    return %c0_i32, %c0_i32_0 : i32, i32
  }
  func.func @transform_3(%arg0: i32) -> (i32, i32) {
    %c0_i32 = arith.constant 0 : i32
    %c0_i32_0 = arith.constant 0 : i32
    %c0_i32_1 = arith.constant 0 : i32
    return %c0_i32, %c0_i32_0 : i32, i32
  }
  func.func @transform_4(%arg0: i32) -> (i32, i32) {
    %c0_i32 = arith.constant 0 : i32
    %c0_i32_0 = arith.constant 0 : i32
    return %arg0, %c0_i32 : i32, i32
  }
}

</mosaic_0001>

<llo_original>
// kernel: tpu_custom_call.1
$region0: #{tpu_custom_call.1}
  #allocation0 [shape = 'u32[]', space=smem, size = 0x4, offset = 0x4, fixed_abs, tag = 'smem constant byte address 0x4 - core index']
  #allocation1 [shape = 'u32[144,128]{1,0:T(1,128)}', space=vmem, size = 0x12000, scoped, tag = 'internal scratch']
  %s0 = inlined_call_operand.hbm [shape: f32[8,64], index: 0, kind: input, shape index: {}]
  %s1 = inlined_call_operand.hbm [shape: f32[8,16], index: 1, kind: input, shape index: {}]
  %s2 = inlined_call_operand.hbm [shape: bf16[592,128], index: 2, kind: input, shape index: {}]
  %s3 = inlined_call_operand.hbm [shape: f32[8,128], index: 3, kind: input, shape index: {}]
  %s4 = inlined_call_operand.hbm [shape: f32[8,128], index: 4, kind: output, shape index: {}]
  %s5 = sld [smem:[#allocation0]]
  $region42: #{tpu_custom_call.1} parent=0
    _
  %s7 = ssub.s32 1, %s5
  %s8 = scalar_select 0, %s7, %s5
  $region1: #{tpu_custom_call.1} parent=0
    #allocation2 [shape = 'u8[4096]{0}', space=vmem, size = 0x1000, scoped, tag = 'input window, operand 0, single buffered']
    #allocation3 [shape = 's32[1]{0}', space=sflag, size = 0x4, scoped, tag = 'scoped memory for tpu_custom_call.1']
    #allocation4 [shape = 's32[1]{0}', space=sflag, size = 0x4, scoped, tag = 'scoped memory for tpu_custom_call.1']
    #allocation5 [shape = 'u8[4096]{0}', space=vmem, size = 0x1000, scoped, tag = 'input window, operand 1, single buffered']
    #allocation6 [shape = 's32[1]{0}', space=sflag, size = 0x4, scoped, tag = 'scoped memory for tpu_custom_call.1']
    #allocation7 [shape = 'u8[151552]{0}', space=vmem, size = 0x25000, scoped, tag = 'input window, operand 2, single buffered']
    #allocation8 [shape = 'u8[4096]{0}', space=vmem, size = 0x1000, scoped, tag = 'input window, operand 3, single buffered']
    #allocation9 [shape = 's32[1]{0}', space=sflag, size = 0x4, scoped, tag = 'scoped memory for tpu_custom_call.1']
    #allocation10 [shape = 'u8[4096]{0}', space=vmem, size = 0x1000, scoped, tag = 'output window, operand 0, single buffered']
    %9 = vsyncpa [#allocation3], 0
    %10 = vsyncpa [#allocation6], 0
    %11 = vsyncpa [#allocation9], 0
    %12 = vsyncpa [#allocation4], 0
    // Predicated region
    $region2: #{tpu_custom_call.1} parent=1 // pred_check
      _
    $region3: #{tpu_custom_call.1} parent=1 // pred_check_branch
      %14 = sbr.rel (0) target = $region5
    $region4: #{tpu_custom_call.1} parent=1 // pred_region
      %s16 = ssub.s32 128, 128
      %17 = vsyncadd [#allocation3], %s16
      %s19 = sshll.u32 [#allocation2], 4
      %s20 = int_to_ptr.vmem [resolvable:$true] %s19
      %22 = dma.hbm_to_vmem [thread:$0]  %s0, 128, %s20, [#allocation3]
    $region5: #{tpu_custom_call.1} parent=1 // pred_fallthru
      _
    // Predicated region
    $region6: #{tpu_custom_call.1} parent=1 // pred_check
      _
    $region7: #{tpu_custom_call.1} parent=1 // pred_check_branch
      %24 = sbr.rel (0) target = $region9
    $region8: #{tpu_custom_call.1} parent=1 // pred_region
      %s26 = ssub.s32 128, 128
      %27 = vsyncadd [#allocation6], %s26
      %s29 = sshll.u32 [#allocation5], 4
      %s30 = int_to_ptr.vmem [resolvable:$true] %s29
      %32 = dma.hbm_to_vmem [thread:$0]  %s1, 128, %s30, [#allocation6]
    $region9: #{tpu_custom_call.1} parent=1 // pred_fallthru
      _
    // Predicated region
    $region10: #{tpu_custom_call.1} parent=1 // pred_check
      _
    $region11: #{tpu_custom_call.1} parent=1 // pred_check_branch
      %34 = sbr.rel (0) target = $region13
    $region12: #{tpu_custom_call.1} parent=1 // pred_region
      %s36 = ssub.s32 4736, 4736
      %37 = vsyncadd [#allocation6], %s36
      %s38 = sshll.u32 [#allocation7], 4
      %s39 = int_to_ptr.vmem [resolvable:$true] %s38
      %44 = dma.hbm_to_vmem [thread:$0]  %s2, 4736, %s39, [#allocation6], 64, 64, 4
    $region13: #{tpu_custom_call.1} parent=1 // pred_fallthru
      _
    // Predicated region
    $region14: #{tpu_custom_call.1} parent=1 // pred_check
      _
    $region15: #{tpu_custom_call.1} parent=1 // pred_check_branch
      %46 = sbr.rel (0) target = $region17
    $region16: #{tpu_custom_call.1} parent=1 // pred_region
      %s48 = ssub.s32 128, 128
      %49 = vsyncadd [#allocation9], %s48
      %s51 = sshll.u32 [#allocation8], 4
      %s52 = int_to_ptr.vmem [resolvable:$true] %s51
      %54 = dma.hbm_to_vmem [thread:$0]  %s3, 128, %s52, [#allocation9]
    $region17: #{tpu_custom_call.1} parent=1 // pred_fallthru
      _
    // Predicated region
    $region18: #{tpu_custom_call.1} parent=1 // pred_check
      _
    $region19: #{tpu_custom_call.1} parent=1 // pred_check_branch
      %56 = sbr.rel (0) target = $region21
    $region20: #{tpu_custom_call.1} parent=1 // pred_region
      %57 = dma.done [#allocation3], 128
    $region21: #{tpu_custom_call.1} parent=1 // pred_fallthru
      _
    // Predicated region
    $region22: #{tpu_custom_call.1} parent=1 // pred_check
      _
    $region23: #{tpu_custom_call.1} parent=1 // pred_check_branch
      %59 = sbr.rel (0) target = $region25
    $region24: #{tpu_custom_call.1} parent=1 // pred_region
      %60 = dma.done [#allocation6], 128
    $region25: #{tpu_custom_call.1} parent=1 // pred_fallthru
      _
    // Predicated region
    $region26: #{tpu_custom_call.1} parent=1 // pred_check
      _
    $region27: #{tpu_custom_call.1} parent=1 // pred_check_branch
      %62 = sbr.rel (0) target = $region29
    $region28: #{tpu_custom_call.1} parent=1 // pred_region
      %63 = dma.done [#allocation6], 4736
    $region29: #{tpu_custom_call.1} parent=1 // pred_fallthru
      _
    // Predicated region
    $region30: #{tpu_custom_call.1} parent=1 // pred_check
      _
    $region31: #{tpu_custom_call.1} parent=1 // pred_check_branch
      %65 = sbr.rel (0) target = $region33
    $region32: #{tpu_custom_call.1} parent=1 // pred_region
      %66 = dma.done [#allocation9], 128
    $region33: #{tpu_custom_call.1} parent=1 // pred_fallthru
      _
    %v68 = vld [vmem:[#allocation2] sm:$0xff]
    %v69 = vpack.c.bf16 %v68, %v68
    %v70 = vld [vmem:[#allocation5] sm:$0xff]
    %v71 = vadd.f32 %v70, 1.0
    %v72 = vlog2.pop %v71
    %v73 = vmul.f32 %v72, 0.6931472
    %v74 = vmul.f32 -0.5, %v70
    %v75 = vadd.f32 %v74, 1.0
    %v76 = vmul.f32 %v75, %v70
    %v77 = vand.u32 2147483647, %v70
    %vm78 = vcmp.lt.f32.partialorder %v77, 0.0004427343
    %v79 = vsel %vm78, %v76, %v73
    %v80 = vpack.c.bf16 %v79, %v79
    %v81 = vld [vmem:[#allocation7] sm:$0xf]
    %v82 = vld [vmem:[#allocation7 + $0x4] sm:$0xf]
    %v83 = vld [vmem:[#allocation7 + $0x8] sm:$0xf]
    %v84 = vld [vmem:[#allocation7 + $0xc] sm:$0xf]
    %v85 = vld [vmem:[#allocation7 + $0x10] sm:$0xf]
    %v86 = vld [vmem:[#allocation7 + $0x14] sm:$0xf]
    %v87 = vld [vmem:[#allocation7 + $0x18] sm:$0xf]
    %v88 = vld [vmem:[#allocation7 + $0x1c] sm:$0xf]
    %v89 = vld [vmem:[#allocation7 + $0x20] sm:$0xf]
    %v90 = vld [vmem:[#allocation7 + $0x24] sm:$0xf]
    %v93 = vunpack.c.l.b16 %v89
    %v94 = vunpack.c.l.b16 %v90
    %v95 = vpack.c.b16 %v94, %v93
    %vm97 = vcmask 130048
    %v99 = vsel %vm97, %v80, 0
    %101 = vmatprep.subr.bf16.mxu0 0
    %102 = vmatpush1.bf16.msra.mxu0 0
    %103 = vmatprep.subr.bf16.mxu0 0
    %104 = vmatpush1.bf16.msra.mxu0 0
    %105 = vmatprep.subr.bf16.mxu0 0
    %106 = vmatpush1.bf16.msra.mxu0 0
    %107 = vmatprep.subr.bf16.mxu0 0
    %108 = vmatpush1.bf16.msra.mxu0 0
    %109 = vmatprep.subr.bf16.mxu0 0
    %110 = vmatpush1.bf16.msra.mxu0 0
    %111 = vmatprep.subr.bf16.mxu0 0
    %112 = vmatpush1.bf16.msra.mxu0 0
    %113 = vmatprep.subr.bf16.mxu0 0
    %114 = vmatpush1.bf16.msra.mxu0 0
    %115 = vmatprep.subr.bf16.mxu0 0
    %116 = vmatpush1.bf16.msra.mxu0 %v95
    %117 = vmatprep.subr.bf16.mxu0 0
    %118 = vmatpush2.bf16.msra.mxu0 0
    %119 = vmatprep.subr.bf16.mxu0 0
    %120 = vmatpush2.bf16.msra.mxu0 0
    %121 = vmatprep.subr.bf16.mxu0 0
    %122 = vmatpush2.bf16.msra.mxu0 0
    %123 = vmatprep.subr.bf16.mxu0 0
    %124 = vmatpush2.bf16.msra.mxu0 0
    %125 = vmatprep.subr.bf16.mxu0 0
    %126 = vmatpush2.bf16.msra.mxu0 0
    %127 = vmatprep.subr.bf16.mxu0 0
    %128 = vmatpush2.bf16.msra.mxu0 0
    %129 = vmatprep.subr.bf16.mxu0 0
    %130 = vmatpush2.bf16.msra.mxu0 0
    %131 = vmatprep.subr.bf16.mxu0 0
    %132 = vmatpush2.bf16.msra.mxu0 0
    %133 = vmatprep.mubr.bf16.mxu0 0
    %134 = vmatmul.mubr.bf16.gmra.mxu0 %v99
    %v135 = vpop.f32.mrf.mxu0
    %v136 = vadd.f32 0.0, %v135
    %v137 = vpop.f32.mrf.mxu0
    %v138 = vpop.f32.mrf.mxu0
    %v139 = vpop.f32.mrf.mxu0
    %140 = vdwg.mxu0
    %v149 = vunpack.c.l.b16 %v81
    %v150 = vunpack.c.l.b16 %v82
    %v151 = vunpack.c.l.b16 %v83
    %v152 = vunpack.c.l.b16 %v84
    %v153 = vunpack.c.l.b16 %v85
    %v154 = vunpack.c.l.b16 %v86
    %v155 = vunpack.c.l.b16 %v87
    %v156 = vunpack.c.l.b16 %v88
    %v157 = vpack.c.b16 %v150, %v149
    %v158 = vpack.c.b16 %v152, %v151
    %v159 = vpack.c.b16 %v154, %v153
    %v160 = vpack.c.b16 %v156, %v155
    %vm165 = vcmask 523264
    %v167 = vsel %vm165, %v69, 0
    %169 = vmatprep.subr.bf16.mxu0 0
    %170 = vmatpush1.bf16.msra.mxu0 0
    %171 = vmatprep.subr.bf16.mxu0 0
    %172 = vmatpush1.bf16.msra.mxu0 0
    %173 = vmatprep.subr.bf16.mxu0 0
    %174 = vmatpush1.bf16.msra.mxu0 0
    %175 = vmatprep.subr.bf16.mxu0 0
    %176 = vmatpush1.bf16.msra.mxu0 0
    %177 = vmatprep.subr.bf16.mxu0 0
    %178 = vmatpush1.bf16.msra.mxu0 %v160
    %179 = vmatprep.subr.bf16.mxu0 0
    %180 = vmatpush1.bf16.msra.mxu0 %v159
    %181 = vmatprep.subr.bf16.mxu0 0
    %182 = vmatpush1.bf16.msra.mxu0 %v158
    %183 = vmatprep.subr.bf16.mxu0 0
    %184 = vmatpush1.bf16.msra.mxu0 %v157
    %185 = vmatprep.subr.bf16.mxu0 0
    %186 = vmatpush2.bf16.msra.mxu0 0
    %187 = vmatprep.subr.bf16.mxu0 0
    %188 = vmatpush2.bf16.msra.mxu0 0
    %189 = vmatprep.subr.bf16.mxu0 0
    %190 = vmatpush2.bf16.msra.mxu0 0
    %191 = vmatprep.subr.bf16.mxu0 0
    %192 = vmatpush2.bf16.msra.mxu0 0
    %193 = vmatprep.subr.bf16.mxu0 0
    %194 = vmatpush2.bf16.msra.mxu0 0
    %195 = vmatprep.subr.bf16.mxu0 0
    %196 = vmatpush2.bf16.msra.mxu0 0
    %197 = vmatprep.subr.bf16.mxu0 0
    %198 = vmatpush2.bf16.msra.mxu0 0
    %199 = vmatprep.subr.bf16.mxu0 0
    %200 = vmatpush2.bf16.msra.mxu0 0
    %201 = vmatprep.mubr.bf16.mxu0 0
    %202 = vmatmul.mubr.bf16.gmra.mxu0 %v167
    %v203 = vpop.f32.mrf.mxu0
    %v204 = vadd.f32 %v136, %v203
    %v205 = vpop.f32.mrf.mxu0
    %v206 = vpop.f32.mrf.mxu0
    %v207 = vpop.f32.mrf.mxu0
    %208 = vdwg.mxu0
    %v209 = vld [vmem:[#allocation8] sm:$0x1]
    %v210 = vlaneseq
    %v211 = vshrl.u32 %v210, 7
    %v212 = vsub.s32 0, %v211
    %v213 = vrot.slane %v209, %v212
    %v214 = vadd.f32 %v204, %v213
    %v215 = vmax.f32 %v214, 0.0
    %v216 = vpack.c.bf16 %v215, %v215
    %v217 = vld [vmem:[#allocation7 + $0x28] sm:$0xf]
    %v218 = vld [vmem:[#allocation7 + $0x2c] sm:$0xf]
    %v219 = vld [vmem:[#allocation7 + $0x30] sm:$0xf]
    %v220 = vld [vmem:[#allocation7 + $0x34] sm:$0xf]
    %v221 = vld [vmem:[#allocation7 + $0x38] sm:$0xf]
    %v222 = vld [vmem:[#allocation7 + $0x3c] sm:$0xf]
    %v223 = vld [vmem:[#allocation7 + $0x40] sm:$0xf]
    %v224 = vld [vmem:[#allocation7 + $0x44] sm:$0xf]
    %v225 = vld [vmem:[#allocation7 + $0x48] sm:$0xf]
    %v226 = vld [vmem:[#allocation7 + $0x4c] sm:$0xf]
    %v227 = vld [vmem:[#allocation7 + $0x50] sm:$0xf]
    %v228 = vld [vmem:[#allocation7 + $0x54] sm:$0xf]
    %v229 = vld [vmem:[#allocation7 + $0x58] sm:$0xf]
    %v230 = vld [vmem:[#allocation7 + $0x5c] sm:$0xf]
    %v231 = vld [vmem:[#allocation7 + $0x60] sm:$0xf]
    %v232 = vld [vmem:[#allocation7 + $0x64] sm:$0xf]
    %v233 = vld [vmem:[#allocation8 + $0x1] sm:$0x1]
    %v234 = vlaneseq
    %v235 = vshrl.u32 %v234, 7
    %v236 = vsub.s32 0, %v235
    %v237 = vrot.slane %v233, %v236
    %v254 = vunpack.c.l.b16 %v217
    %v255 = vunpack.c.l.b16 %v218
    %v256 = vunpack.c.l.b16 %v219
    %v257 = vunpack.c.l.b16 %v220
    %v258 = vunpack.c.l.b16 %v221
    %v259 = vunpack.c.l.b16 %v222
    %v260 = vunpack.c.l.b16 %v223
    %v261 = vunpack.c.l.b16 %v224
    %v262 = vunpack.c.l.b16 %v225
    %v263 = vunpack.c.l.b16 %v226
    %v264 = vunpack.c.l.b16 %v227
    %v265 = vunpack.c.l.b16 %v228
    %v266 = vunpack.c.l.b16 %v229
    %v267 = vunpack.c.l.b16 %v230
    %v268 = vunpack.c.l.b16 %v231
    %v269 = vunpack.c.l.b16 %v232
    %v270 = vpack.c.b16 %v255, %v254
    %v271 = vpack.c.b16 %v257, %v256
    %v272 = vpack.c.b16 %v259, %v258
    %v273 = vpack.c.b16 %v261, %v260
    %v274 = vpack.c.b16 %v263, %v262
    %v275 = vpack.c.b16 %v265, %v264
    %v276 = vpack.c.b16 %v267, %v266
    %v277 = vpack.c.b16 %v269, %v268
    %286 = vmatprep.subr.bf16.mxu0 0
    %287 = vmatpush1.bf16.msra.mxu0 %v277
    %288 = vmatprep.subr.bf16.mxu0 0
    %289 = vmatpush1.bf16.msra.mxu0 %v276
    %290 = vmatprep.subr.bf16.mxu0 0
    %291 = vmatpush1.bf16.msra.mxu0 %v275
    %292 = vmatprep.subr.bf16.mxu0 0
    %293 = vmatpush1.bf16.msra.mxu0 %v274
    %294 = vmatprep.subr.bf16.mxu0 0
    %295 = vmatpush1.bf16.msra.mxu0 %v273
    %296 = vmatprep.subr.bf16.mxu0 0
    %297 = vmatpush1.bf16.msra.mxu0 %v272
    %298 = vmatprep.subr.bf16.mxu0 0
    %299 = vmatpush1.bf16.msra.mxu0 %v271
    %300 = vmatprep.subr.bf16.mxu0 0
    %301 = vmatpush1.bf16.msra.mxu0 %v270
    %302 = vmatprep.subr.bf16.mxu0 0
    %303 = vmatpush2.bf16.msra.mxu0 0
    %304 = vmatprep.subr.bf16.mxu0 0
    %305 = vmatpush2.bf16.msra.mxu0 0
    %306 = vmatprep.subr.bf16.mxu0 0
    %307 = vmatpush2.bf16.msra.mxu0 0
    %308 = vmatprep.subr.bf16.mxu0 0
    %309 = vmatpush2.bf16.msra.mxu0 0
    %310 = vmatprep.subr.bf16.mxu0 0
    %311 = vmatpush2.bf16.msra.mxu0 0
    %312 = vmatprep.subr.bf16.mxu0 0
    %313 = vmatpush2.bf16.msra.mxu0 0
    %314 = vmatprep.subr.bf16.mxu0 0
    %315 = vmatpush2.bf16.msra.mxu0 0
    %316 = vmatprep.subr.bf16.mxu0 0
    %317 = vmatpush2.bf16.msra.mxu0 0
    %318 = vmatprep.mubr.bf16.mxu0 0
    %319 = vmatmul.mubr.bf16.gmra.mxu0 %v216
    %v320 = vpop.f32.mrf.mxu0
    %v321 = vadd.f32 %v237, %v320
    %v322 = vpop.f32.mrf.mxu0
    %v323 = vpop.f32.mrf.mxu0
    %v324 = vpop.f32.mrf.mxu0
    %325 = vdwg.mxu0
    %v326 = vmax.f32 %v321, 0.0
    %v327 = vpack.c.bf16 %v326, %v326
    %v328 = vld [vmem:[#allocation7 + $0x68] sm:$0xf]
    %v329 = vld [vmem:[#allocation7 + $0x6c] sm:$0xf]
    %v330 = vld [vmem:[#allocation7 + $0x70] sm:$0xf]
    %v331 = vld [vmem:[#allocation7 + $0x74] sm:$0xf]
    %v332 = vld [vmem:[#allocation7 + $0x78] sm:$0xf]
    %v333 = vld [vmem:[#allocation7 + $0x7c] sm:$0xf]
    %v334 = vld [vmem:[#allocation7 + $0x80] sm:$0xf]
    %v335 = vld [vmem:[#allocation7 + $0x84] sm:$0xf]
    %v336 = vld [vmem:[#allocation7 + $0x88] sm:$0xf]
    %v337 = vld [vmem:[#allocation7 + $0x8c] sm:$0xf]
    %v338 = vld [vmem:[#allocation7 + $0x90] sm:$0xf]
    %v339 = vld [vmem:[#allocation7 + $0x94] sm:$0xf]
    %v340 = vld [vmem:[#allocation7 + $0x98] sm:$0xf]
    %v341 = vld [vmem:[#allocation7 + $0x9c] sm:$0xf]
    %v342 = vld [vmem:[#allocation7 + $0xa0] sm:$0xf]
    %v343 = vld [vmem:[#allocation7 + $0xa4] sm:$0xf]
    %v344 = vld [vmem:[#allocation8 + $0x2] sm:$0x1]
    %v345 = vlaneseq
    %v346 = vshrl.u32 %v345, 7
    %v347 = vsub.s32 0, %v346
    %v348 = vrot.slane %v344, %v347
    %v365 = vunpack.c.l.b16 %v328
    %v366 = vunpack.c.l.b16 %v329
    %v367 = vunpack.c.l.b16 %v330
    %v368 = vunpack.c.l.b16 %v331
    %v369 = vunpack.c.l.b16 %v332
    %v370 = vunpack.c.l.b16 %v333
    %v371 = vunpack.c.l.b16 %v334
    %v372 = vunpack.c.l.b16 %v335
    %v373 = vunpack.c.l.b16 %v336
    %v374 = vunpack.c.l.b16 %v337
    %v375 = vunpack.c.l.b16 %v338
    %v376 = vunpack.c.l.b16 %v339
    %v377 = vunpack.c.l.b16 %v340
    %v378 = vunpack.c.l.b16 %v341
    %v379 = vunpack.c.l.b16 %v342
    %v380 = vunpack.c.l.b16 %v343
    %v381 = vpack.c.b16 %v366, %v365
    %v382 = vpack.c.b16 %v368, %v367
    %v383 = vpack.c.b16 %v370, %v369
    %v384 = vpack.c.b16 %v372, %v371
    %v385 = vpack.c.b16 %v374, %v373
    %v386 = vpack.c.b16 %v376, %v375
    %v387 = vpack.c.b16 %v378, %v377
    %v388 = vpack.c.b16 %v380, %v379
    %397 = vmatprep.subr.bf16.mxu0 0
    %398 = vmatpush1.bf16.msra.mxu0 %v388
    %399 = vmatprep.subr.bf16.mxu0 0
    %400 = vmatpush1.bf16.msra.mxu0 %v387
    %401 = vmatprep.subr.bf16.mxu0 0
    %402 = vmatpush1.bf16.msra.mxu0 %v386
    %403 = vmatprep.subr.bf16.mxu0 0
    %404 = vmatpush1.bf16.msra.mxu0 %v385
    %405 = vmatprep.subr.bf16.mxu0 0
    %406 = vmatpush1.bf16.msra.mxu0 %v384
    %407 = vmatprep.subr.bf16.mxu0 0
    %408 = vmatpush1.bf16.msra.mxu0 %v383
    %409 = vmatprep.subr.bf16.mxu0 0
    %410 = vmatpush1.bf16.msra.mxu0 %v382
    %411 = vmatprep.subr.bf16.mxu0 0
    %412 = vmatpush1.bf16.msra.mxu0 %v381
    %413 = vmatprep.subr.bf16.mxu0 0
    %414 = vmatpush2.bf16.msra.mxu0 0
    %415 = vmatprep.subr.bf16.mxu0 0
    %416 = vmatpush2.bf16.msra.mxu0 0
    %417 = vmatprep.subr.bf16.mxu0 0
    %418 = vmatpush2.bf16.msra.mxu0 0
    %419 = vmatprep.subr.bf16.mxu0 0
    %420 = vmatpush2.bf16.msra.mxu0 0
    %421 = vmatprep.subr.bf16.mxu0 0
    %422 = vmatpush2.bf16.msra.mxu0 0
    %423 = vmatprep.subr.bf16.mxu0 0
    %424 = vmatpush2.bf16.msra.mxu0 0
    %425 = vmatprep.subr.bf16.mxu0 0
    %426 = vmatpush2.bf16.msra.mxu0 0
    %427 = vmatprep.subr.bf16.mxu0 0
    %428 = vmatpush2.bf16.msra.mxu0 0
    %429 = vmatprep.mubr.bf16.mxu0 0
    %430 = vmatmul.mubr.bf16.gmra.mxu0 %v327
    %v431 = vpop.f32.mrf.mxu0
    %v432 = vadd.f32 %v348, %v431
    %v433 = vpop.f32.mrf.mxu0
    %v434 = vpop.f32.mrf.mxu0
    %v435 = vpop.f32.mrf.mxu0
    %436 = vdwg.mxu0
    %v437 = vmax.f32 %v432, 0.0
    %v438 = vpack.c.bf16 %v437, %v437
    %v439 = vld [vmem:[#allocation7 + $0xa8] sm:$0xf]
    %v440 = vld [vmem:[#allocation7 + $0xac] sm:$0xf]
    %v441 = vld [vmem:[#allocation7 + $0xb0] sm:$0xf]
    %v442 = vld [vmem:[#allocation7 + $0xb4] sm:$0xf]
    %v443 = vld [vmem:[#allocation7 + $0xb8] sm:$0xf]
    %v444 = vld [vmem:[#allocation7 + $0xbc] sm:$0xf]
    %v445 = vld [vmem:[#allocation7 + $0xc0] sm:$0xf]
    %v446 = vld [vmem:[#allocation7 + $0xc4] sm:$0xf]
    %v447 = vld [vmem:[#allocation7 + $0xc8] sm:$0xf]
    %v448 = vld [vmem:[#allocation7 + $0xcc] sm:$0xf]
    %v449 = vld [vmem:[#allocation7 + $0xd0] sm:$0xf]
    %v450 = vld [vmem:[#allocation7 + $0xd4] sm:$0xf]
    %v451 = vld [vmem:[#allocation7 + $0xd8] sm:$0xf]
    %v452 = vld [vmem:[#allocation7 + $0xdc] sm:$0xf]
    %v453 = vld [vmem:[#allocation7 + $0xe0] sm:$0xf]
    %v454 = vld [vmem:[#allocation7 + $0xe4] sm:$0xf]
    %v455 = vld [vmem:[#allocation8 + $0x3] sm:$0x1]
    %v456 = vlaneseq
    %v457 = vshrl.u32 %v456, 7
    %v458 = vsub.s32 0, %v457
    %v459 = vrot.slane %v455, %v458
    %v476 = vunpack.c.l.b16 %v439
    %v477 = vunpack.c.l.b16 %v440
    %v478 = vunpack.c.l.b16 %v441
    %v479 = vunpack.c.l.b16 %v442
    %v480 = vunpack.c.l.b16 %v443
    %v481 = vunpack.c.l.b16 %v444
    %v482 = vunpack.c.l.b16 %v445
    %v483 = vunpack.c.l.b16 %v446
    %v484 = vunpack.c.l.b16 %v447
    %v485 = vunpack.c.l.b16 %v448
    %v486 = vunpack.c.l.b16 %v449
    %v487 = vunpack.c.l.b16 %v450
    %v488 = vunpack.c.l.b16 %v451
    %v489 = vunpack.c.l.b16 %v452
    %v490 = vunpack.c.l.b16 %v453
    %v491 = vunpack.c.l.b16 %v454
    %v492 = vpack.c.b16 %v477, %v476
    %v493 = vpack.c.b16 %v479, %v478
    %v494 = vpack.c.b16 %v481, %v480
    %v495 = vpack.c.b16 %v483, %v482
    %v496 = vpack.c.b16 %v485, %v484
    %v497 = vpack.c.b16 %v487, %v486
    %v498 = vpack.c.b16 %v489, %v488
    %v499 = vpack.c.b16 %v491, %v490
    %508 = vmatprep.subr.bf16.mxu0 0
    %509 = vmatpush1.bf16.msra.mxu0 %v499
    %510 = vmatprep.subr.bf16.mxu0 0
    %511 = vmatpush1.bf16.msra.mxu0 %v498
    %512 = vmatprep.subr.bf16.mxu0 0
    %513 = vmatpush1.bf16.msra.mxu0 %v497
    %514 = vmatprep.subr.bf16.mxu0 0
    %515 = vmatpush1.bf16.msra.mxu0 %v496
    %516 = vmatprep.subr.bf16.mxu0 0
    %517 = vmatpush1.bf16.msra.mxu0 %v495
    %518 = vmatprep.subr.bf16.mxu0 0
    %519 = vmatpush1.bf16.msra.mxu0 %v494
    %520 = vmatprep.subr.bf16.mxu0 0
    %521 = vmatpush1.bf16.msra.mxu0 %v493
    %522 = vmatprep.subr.bf16.mxu0 0
    %523 = vmatpush1.bf16.msra.mxu0 %v492
    %524 = vmatprep.subr.bf16.mxu0 0
    %525 = vmatpush2.bf16.msra.mxu0 0
    %526 = vmatprep.subr.bf16.mxu0 0
    %527 = vmatpush2.bf16.msra.mxu0 0
    %528 = vmatprep.subr.bf16.mxu0 0
    %529 = vmatpush2.bf16.msra.mxu0 0
    %530 = vmatprep.subr.bf16.mxu0 0
    %531 = vmatpush2.bf16.msra.mxu0 0
    %532 = vmatprep.subr.bf16.mxu0 0
    %533 = vmatpush2.bf16.msra.mxu0 0
    %534 = vmatprep.subr.bf16.mxu0 0
    %535 = vmatpush2.bf16.msra.mxu0 0
    %536 = vmatprep.subr.bf16.mxu0 0
    %537 = vmatpush2.bf16.msra.mxu0 0
    %538 = vmatprep.subr.bf16.mxu0 0
    %539 = vmatpush2.bf16.msra.mxu0 0
    %540 = vmatprep.mubr.bf16.mxu0 0
    %541 = vmatmul.mubr.bf16.gmra.mxu0 %v438
    %v542 = vpop.f32.mrf.mxu0
    %v543 = vadd.f32 %v459, %v542
    %v544 = vpop.f32.mrf.mxu0
    %v545 = vpop.f32.mrf.mxu0
    %v546 = vpop.f32.mrf.mxu0
    %547 = vdwg.mxu0
    %v548 = vmax.f32 %v543, 0.0
    %v549 = vpack.c.bf16 %v548, %v548
    %v550 = vld [vmem:[#allocation7 + $0xe8] sm:$0xf]
    %v551 = vld [vmem:[#allocation7 + $0xec] sm:$0xf]
    %v552 = vld [vmem:[#allocation7 + $0xf0] sm:$0xf]
    %v553 = vld [vmem:[#allocation7 + $0xf4] sm:$0xf]
    %v554 = vld [vmem:[#allocation7 + $0xf8] sm:$0xf]
    %v555 = vld [vmem:[#allocation7 + $0xfc] sm:$0xf]
    %v556 = vld [vmem:[#allocation7 + $0x100] sm:$0xf]
    %v557 = vld [vmem:[#allocation7 + $0x104] sm:$0xf]
    %v558 = vld [vmem:[#allocation7 + $0x108] sm:$0xf]
    %v559 = vld [vmem:[#allocation7 + $0x10c] sm:$0xf]
    %v560 = vld [vmem:[#allocation7 + $0x110] sm:$0xf]
    %v561 = vld [vmem:[#allocation7 + $0x114] sm:$0xf]
    %v562 = vld [vmem:[#allocation7 + $0x118] sm:$0xf]
    %v563 = vld [vmem:[#allocation7 + $0x11c] sm:$0xf]
    %v564 = vld [vmem:[#allocation7 + $0x120] sm:$0xf]
    %v565 = vld [vmem:[#allocation7 + $0x124] sm:$0xf]
    %v566 = vld [vmem:[#allocation8 + $0x4] sm:$0x1]
    %v567 = vlaneseq
    %v568 = vshrl.u32 %v567, 7
    %v569 = vsub.s32 0, %v568
    %v570 = vrot.slane %v566, %v569
    %v587 = vunpack.c.l.b16 %v550
    %v588 = vunpack.c.l.b16 %v551
    %v589 = vunpack.c.l.b16 %v552
    %v590 = vunpack.c.l.b16 %v553
    %v591 = vunpack.c.l.b16 %v554
    %v592 = vunpack.c.l.b16 %v555
    %v593 = vunpack.c.l.b16 %v556
    %v594 = vunpack.c.l.b16 %v557
    %v595 = vunpack.c.l.b16 %v558
    %v596 = vunpack.c.l.b16 %v559
    %v597 = vunpack.c.l.b16 %v560
    %v598 = vunpack.c.l.b16 %v561
    %v599 = vunpack.c.l.b16 %v562
    %v600 = vunpack.c.l.b16 %v563
    %v601 = vunpack.c.l.b16 %v564
    %v602 = vunpack.c.l.b16 %v565
    %v603 = vpack.c.b16 %v588, %v587
    %v604 = vpack.c.b16 %v590, %v589
    %v605 = vpack.c.b16 %v592, %v591
    %v606 = vpack.c.b16 %v594, %v593
    %v607 = vpack.c.b16 %v596, %v595
    %v608 = vpack.c.b16 %v598, %v597
    %v609 = vpack.c.b16 %v600, %v599
    %v610 = vpack.c.b16 %v602, %v601
    %619 = vmatprep.subr.bf16.mxu0 0
    %620 = vmatpush1.bf16.msra.mxu0 %v610
    %621 = vmatprep.subr.bf16.mxu0 0
    %622 = vmatpush1.bf16.msra.mxu0 %v609
    %623 = vmatprep.subr.bf16.mxu0 0
    %624 = vmatpush1.bf16.msra.mxu0 %v608
    %625 = vmatprep.subr.bf16.mxu0 0
    %626 = vmatpush1.bf16.msra.mxu0 %v607
    %627 = vmatprep.subr.bf16.mxu0 0
    %628 = vmatpush1.bf16.msra.mxu0 %v606
    %629 = vmatprep.subr.bf16.mxu0 0
    %630 = vmatpush1.bf16.msra.mxu0 %v605
    %631 = vmatprep.subr.bf16.mxu0 0
    %632 = vmatpush1.bf16.msra.mxu0 %v604
    %633 = vmatprep.subr.bf16.mxu0 0
    %634 = vmatpush1.bf16.msra.mxu0 %v603
    %635 = vmatprep.subr.bf16.mxu0 0
    %636 = vmatpush2.bf16.msra.mxu0 0
    %637 = vmatprep.subr.bf16.mxu0 0
    %638 = vmatpush2.bf16.msra.mxu0 0
    %639 = vmatprep.subr.bf16.mxu0 0
    %640 = vmatpush2.bf16.msra.mxu0 0
    %641 = vmatprep.subr.bf16.mxu0 0
    %642 = vmatpush2.bf16.msra.mxu0 0
    %643 = vmatprep.subr.bf16.mxu0 0
    %644 = vmatpush2.bf16.msra.mxu0 0
    %645 = vmatprep.subr.bf16.mxu0 0
    %646 = vmatpush2.bf16.msra.mxu0 0
    %647 = vmatprep.subr.bf16.mxu0 0
    %648 = vmatpush2.bf16.msra.mxu0 0
    %649 = vmatprep.subr.bf16.mxu0 0
    %650 = vmatpush2.bf16.msra.mxu0 0
    %651 = vmatprep.mubr.bf16.mxu0 0
    %652 = vmatmul.mubr.bf16.gmra.mxu0 %v549
    %v653 = vpop.f32.mrf.mxu0
    %v654 = vadd.f32 %v570, %v653
    %v655 = vpop.f32.mrf.mxu0
    %v656 = vpop.f32.mrf.mxu0
    %v657 = vpop.f32.mrf.mxu0
    %658 = vdwg.mxu0
    %v659 = vxor.u32 %v654, 2147483648
    %v660 = vmul.f32 %v659, 1.442695
    %v661 = vpow.pop %v660
    %v662 = vadd.f32 %v661, 1.0
    %v663 = vrcp.pop %v662
    %v664 = vmul.f32 1.0, %v663
    %665 = vst [vmem:[#allocation10] sm:$0xff] %v664
    // Predicated region
    $region34: #{tpu_custom_call.1} parent=1 // pred_check
      _
    $region35: #{tpu_custom_call.1} parent=1 // pred_check_branch
      %667 = sbr.rel (0) target = $region37
    $region36: #{tpu_custom_call.1} parent=1 // pred_region
      %s669 = ssub.s32 128, 128
      %670 = vsyncadd [#allocation4], %s669
      %s672 = sshll.u32 [#allocation10], 4
      %s673 = int_to_ptr.vmem [resolvable:$true] %s672
      %675 = dma.vmem_to_hbm [thread:$0]  %s673, 128, %s4, [#allocation4]
    $region37: #{tpu_custom_call.1} parent=1 // pred_fallthru
      _
    // Predicated region
    $region38: #{tpu_custom_call.1} parent=1 // pred_check
      _
    $region39: #{tpu_custom_call.1} parent=1 // pred_check_branch
      %677 = sbr.rel (0) target = $region41
    $region40: #{tpu_custom_call.1} parent=1 // pred_region
      %678 = dma.done [#allocation4], 128
    $region41: #{tpu_custom_call.1} parent=1 // pred_fallthru
      _
    %679 = vsyncpa [#allocation3], 1
    %680 = vsyncpa [#allocation6], 1
    %681 = vsyncpa [#allocation9], 1
    %682 = vsyncpa [#allocation4], 1

</llo_original>
